<compile_context>
chip_gen: v7x
topology: tpu7x:2x2x1
jax: 0.10.0
libtpu: 0.0.40
codegen_flags: <defaults>
</compile_context>

<pallas_src>
import jax
import jax.numpy as jnp
from jax.experimental import pallas as pl
from jax.experimental.pallas import tpu as pltpu


D_IN = 256
D_UP = 512
D_DOWN = 256
D_OUT = 128
EPS = 1e-6


def encoder_kernel(x_ref, wup_ref, bup_ref, wdn_ref, bdn_ref,
                   w2_ref, b2_ref, alpha_ref, beta_ref, o_ref):
    x = x_ref[...]

    # NOTE: the `input_layer` branch of the original forward is dead code
    # (its result is never used), so it is not computed here.

    # up_proj + ReLU
    up = jnp.dot(x, wup_ref[...], preferred_element_type=jnp.float32) + bup_ref[...]
    up = jnp.maximum(up, 0.0)

    # down_proj + ReLU
    dn = jnp.dot(up, wdn_ref[...], preferred_element_type=jnp.float32) + bdn_ref[...]
    dn = jnp.maximum(dn, 0.0)

    # down_proj_2 + ReLU
    d2 = jnp.dot(dn, w2_ref[...], preferred_element_type=jnp.float32) + b2_ref[...]
    d2 = jnp.maximum(d2, 0.0)

    # "LlamaRMSNorm" (actually mean/std standardization, torch.std -> unbiased, ddof=1)
    n = d2.shape[-1]
    mean = jnp.mean(d2, axis=-1, keepdims=True)
    centered = d2 - mean
    var_unbiased = jnp.sum(centered * centered, axis=-1, keepdims=True) / (n - 1)
    std = jnp.sqrt(var_unbiased)
    # One exact reciprocal per row (a (tm,1) column) instead of a (tm,128)
    # element-wise divide; then a cheap broadcast multiply on the VPU.
    inv_std = 1.0 / (std + EPS)
    o_ref[...] = alpha_ref[...] * (centered * inv_std) + beta_ref[...]


def _round_up(x, n):
    return ((x + n - 1) // n) * n


def custom_llama_encoder_layer(x, params, *, tm=512):
    """x: (batch, seq, 256) float32 -> (batch, seq, 128) float32."""
    b, s, d = x.shape
    assert d == D_IN
    assert tm % 8 == 0, "row tile must be a multiple of 8 (sublane width)"
    m = b * s

    # Pick an effective row tile:
    #  * never larger than the requested tm,
    #  * keep at least 2 grid steps when possible (v7x has 2 TensorCores and
    #    shards the 'parallel' axis across them),
    #  * always a multiple of 8 so the BlockSpec obeys the (8, 128) rule.
    tm_eff = min(tm, max(8, _round_up(pl.cdiv(m, 2), 8)))
    m_pad = _round_up(m, tm_eff)
    grid_m = m_pad // tm_eff

    x2 = x.reshape(m, d)
    if m_pad != m:
        # Zero padding is safe: padded rows normalize to a finite value and are
        # sliced off below.
        x2 = jnp.pad(x2, ((0, m_pad - m), (0, 0)))

    rep = lambda i: (0, 0)  # weights replicated across the row-tile grid

    flops = 2 * m_pad * (D_IN * D_UP + D_UP * D_DOWN + D_DOWN * D_OUT)
    weight_bytes = 4 * (D_IN * D_UP + D_UP * D_DOWN + D_DOWN * D_OUT
                        + D_UP + D_DOWN + D_OUT + D_OUT + D_OUT)
    bytes_accessed = m_pad * (D_IN + D_OUT) * 4 + weight_bytes

    out2 = pl.pallas_call(
        encoder_kernel,
        out_shape=jax.ShapeDtypeStruct((m_pad, D_OUT), jnp.float32),
        grid_spec=pltpu.PrefetchScalarGridSpec(
            num_scalar_prefetch=0,
            grid=(grid_m,),
            in_specs=[
                pl.BlockSpec((tm_eff, D_IN), lambda i: (i, 0)),
                pl.BlockSpec((D_IN, D_UP), rep),
                pl.BlockSpec((1, D_UP), rep),
                pl.BlockSpec((D_UP, D_DOWN), rep),
                pl.BlockSpec((1, D_DOWN), rep),
                pl.BlockSpec((D_DOWN, D_OUT), rep),
                pl.BlockSpec((1, D_OUT), rep),
                pl.BlockSpec((1, D_OUT), rep),
                pl.BlockSpec((1, D_OUT), rep),
            ],
            out_specs=pl.BlockSpec((tm_eff, D_OUT), lambda i: (i, 0)),
        ),
        compiler_params=pltpu.CompilerParams(
            dimension_semantics=("parallel",),
            vmem_limit_bytes=32 * 1024 * 1024,
        ),
        cost_estimate=pl.CostEstimate(
            flops=flops,
            transcendentals=m_pad,           # one sqrt / reciprocal per row
            bytes_accessed=bytes_accessed,
        ),
    )(
        x2,
        params["w_up"], params["b_up"],
        params["w_down"], params["b_down"],
        params["w_down2"], params["b_down2"],
        params["alpha"], params["beta"],
    )
    return out2[:m].reshape(b, s, D_OUT)


def init_params(key):
    ks = jax.random.split(key, 8)
    scale = 0.02
    p = {
        # input_layer weights exist in the module but are dead code in forward.
        "w_in": scale * jax.random.normal(ks[0], (D_IN, D_IN), jnp.float32),
        "b_in": scale * jax.random.normal(ks[1], (1, D_IN), jnp.float32),
        "w_up": scale * jax.random.normal(ks[2], (D_IN, D_UP), jnp.float32),
        "b_up": scale * jax.random.normal(ks[3], (1, D_UP), jnp.float32),
        "w_down": scale * jax.random.normal(ks[4], (D_UP, D_DOWN), jnp.float32),
        "b_down": scale * jax.random.normal(ks[5], (1, D_DOWN), jnp.float32),
        "w_down2": scale * jax.random.normal(ks[6], (D_DOWN, D_OUT), jnp.float32),
        "b_down2": scale * jax.random.normal(ks[7], (1, D_OUT), jnp.float32),
        "alpha": jnp.ones((1, D_OUT), jnp.float32),
        "beta": jnp.zeros((1, D_OUT), jnp.float32),
    }
    return p


def reference_forward(x, p):
    """Pure-JAX reference matching the PyTorch forward."""
    up = jax.nn.relu(x @ p["w_up"] + p["b_up"][0])
    dn = jax.nn.relu(up @ p["w_down"] + p["b_down"][0])
    d2 = jax.nn.relu(dn @ p["w_down2"] + p["b_down2"][0])
    mean = jnp.mean(d2, axis=-1, keepdims=True)
    std = jnp.std(d2, axis=-1, keepdims=True, ddof=1)  # torch.std is unbiased
    return p["alpha"][0] * (d2 - mean) / (std + EPS) + p["beta"][0]


if __name__ == "__main__":
    key = jax.random.PRNGKey(0)
    pkey, xkey, xkey2 = jax.random.split(key, 3)
    params = init_params(pkey)

    # Small, tile-aligned case.
    batch, seq = 2, 8
    x = jax.random.normal(xkey, (batch, seq, D_IN), jnp.float32)
    out = jax.block_until_ready(custom_llama_encoder_layer(x, params))
    ref = reference_forward(x, params)
    assert out.shape == (batch, seq, D_OUT)
    assert jnp.allclose(out, ref, atol=1e-4, rtol=1e-4), "mismatch vs reference"

    # Ragged case (exercises the padding path: 30 tokens, not a multiple of 8).
    batch2, seq2 = 3, 10
    x2 = jax.random.normal(xkey2, (batch2, seq2, D_IN), jnp.float32)
    out2 = jax.block_until_ready(custom_llama_encoder_layer(x2, params))
    ref2 = reference_forward(x2, params)
    assert out2.shape == (batch2, seq2, D_OUT)
    assert jnp.allclose(out2, ref2, atol=1e-4, rtol=1e-4), "mismatch vs reference (ragged)"

    print("KERNEL_OK")
</pallas_src>

<mosaic_0001>
module attributes {stable_mosaic.version = 11 : i64} {
  func.func @encoder_kernel(%arg0: i32, %arg1: memref<8x256xf32, #tpu.memory_space<vmem>>, %arg2: memref<256x512xf32, #tpu.memory_space<vmem>>, %arg3: memref<1x512xf32, #tpu.memory_space<vmem>>, %arg4: memref<512x256xf32, #tpu.memory_space<vmem>>, %arg5: memref<1x256xf32, #tpu.memory_space<vmem>>, %arg6: memref<256x128xf32, #tpu.memory_space<vmem>>, %arg7: memref<1x128xf32, #tpu.memory_space<vmem>>, %arg8: memref<1x128xf32, #tpu.memory_space<vmem>>, %arg9: memref<1x128xf32, #tpu.memory_space<vmem>>, %arg10: memref<8x128xf32, #tpu.memory_space<vmem>>) attributes {dimension_semantics = [#tpu.dimension_semantics<parallel>], iteration_bounds = array<i64: 2>, scalar_prefetch = 0 : i64, scratch_operands = 0 : i64, tpu.core_type = #tpu.core_type<tc>, window_params = [{transform_indices = @transform_0, window_bounds = array<i64: 8, 256>}, {pipeline_mode = #tpu.pipeline_mode<synchronous>, transform_indices = @transform_1, window_bounds = array<i64: 256, 512>}, {pipeline_mode = #tpu.pipeline_mode<synchronous>, transform_indices = @transform_2, window_bounds = array<i64: 1, 512>}, {pipeline_mode = #tpu.pipeline_mode<synchronous>, transform_indices = @transform_3, window_bounds = array<i64: 512, 256>}, {pipeline_mode = #tpu.pipeline_mode<synchronous>, transform_indices = @transform_4, window_bounds = array<i64: 1, 256>}, {pipeline_mode = #tpu.pipeline_mode<synchronous>, transform_indices = @transform_5, window_bounds = array<i64: 256, 128>}, {pipeline_mode = #tpu.pipeline_mode<synchronous>, transform_indices = @transform_6, window_bounds = array<i64: 1, 128>}, {pipeline_mode = #tpu.pipeline_mode<synchronous>, transform_indices = @transform_7, window_bounds = array<i64: 1, 128>}, {pipeline_mode = #tpu.pipeline_mode<synchronous>, transform_indices = @transform_8, window_bounds = array<i64: 1, 128>}, {transform_indices = @transform_9, window_bounds = array<i64: 8, 128>}]} {
    %c0 = arith.constant 0 : index
    %c0_0 = arith.constant 0 : index
    %0 = vector.load %arg1[%c0, %c0_0] : memref<8x256xf32, #tpu.memory_space<vmem>>, vector<8x256xf32>
    %c0_1 = arith.constant 0 : index
    %c0_2 = arith.constant 0 : index
    %1 = vector.load %arg2[%c0_1, %c0_2] : memref<256x512xf32, #tpu.memory_space<vmem>>, vector<256x512xf32>
    %cst = arith.constant dense<0.000000e+00> : vector<8x512xf32>
    %2 = tpu.matmul %0, %1, %cst {dimension_numbers = #tpu.dot_dimension_numbers<[1], [0], [0], [1], [0, 0, 1, 1], [], []>} : vector<8x256xf32>, vector<256x512xf32>, vector<8x512xf32> -> vector<8x512xf32>
    %c0_3 = arith.constant 0 : index
    %c0_4 = arith.constant 0 : index
    %3 = vector.load %arg3[%c0_3, %c0_4] : memref<1x512xf32, #tpu.memory_space<vmem>>, vector<1x512xf32>
    %4 = vector.broadcast %3 : vector<1x512xf32> to vector<8x512xf32>
    %5 = arith.addf %2, %4 : vector<8x512xf32>
    %cst_5 = arith.constant 0.000000e+00 : f32
    %6 = vector.broadcast %cst_5 : f32 to vector<8x512xf32>
    %7 = arith.maximumf %5, %6 : vector<8x512xf32>
    %c0_6 = arith.constant 0 : index
    %c0_7 = arith.constant 0 : index
    %8 = vector.load %arg4[%c0_6, %c0_7] : memref<512x256xf32, #tpu.memory_space<vmem>>, vector<512x256xf32>
    %cst_8 = arith.constant dense<0.000000e+00> : vector<8x256xf32>
    %9 = tpu.matmul %7, %8, %cst_8 {dimension_numbers = #tpu.dot_dimension_numbers<[1], [0], [0], [1], [0, 0, 1, 1], [], []>} : vector<8x512xf32>, vector<512x256xf32>, vector<8x256xf32> -> vector<8x256xf32>
    %c0_9 = arith.constant 0 : index
    %c0_10 = arith.constant 0 : index
    %10 = vector.load %arg5[%c0_9, %c0_10] : memref<1x256xf32, #tpu.memory_space<vmem>>, vector<1x256xf32>
    %11 = vector.broadcast %10 : vector<1x256xf32> to vector<8x256xf32>
    %12 = arith.addf %9, %11 : vector<8x256xf32>
    %cst_11 = arith.constant 0.000000e+00 : f32
    %13 = vector.broadcast %cst_11 : f32 to vector<8x256xf32>
    %14 = arith.maximumf %12, %13 : vector<8x256xf32>
    %c0_12 = arith.constant 0 : index
    %c0_13 = arith.constant 0 : index
    %15 = vector.load %arg6[%c0_12, %c0_13] : memref<256x128xf32, #tpu.memory_space<vmem>>, vector<256x128xf32>
    %cst_14 = arith.constant dense<0.000000e+00> : vector<8x128xf32>
    %16 = tpu.matmul %14, %15, %cst_14 {dimension_numbers = #tpu.dot_dimension_numbers<[1], [0], [0], [1], [0, 0, 1, 1], [], []>} : vector<8x256xf32>, vector<256x128xf32>, vector<8x128xf32> -> vector<8x128xf32>
    %c0_15 = arith.constant 0 : index
    %c0_16 = arith.constant 0 : index
    %17 = vector.load %arg7[%c0_15, %c0_16] : memref<1x128xf32, #tpu.memory_space<vmem>>, vector<1x128xf32>
    %18 = vector.broadcast %17 : vector<1x128xf32> to vector<8x128xf32>
    %19 = arith.addf %16, %18 : vector<8x128xf32>
    %cst_17 = arith.constant 0.000000e+00 : f32
    %20 = vector.broadcast %cst_17 : f32 to vector<8x128xf32>
    %21 = arith.maximumf %19, %20 : vector<8x128xf32>
    %cst_18 = arith.constant dense<0.000000e+00> : vector<8xf32>
    %22 = vector.multi_reduction <add>, %21, %cst_18 [1] : vector<8x128xf32> to vector<8xf32>
    %23 = vector.shape_cast %22 : vector<8xf32> to vector<8x1xf32>
    %cst_19 = arith.constant 1.280000e+02 : f32
    %24 = vector.broadcast %cst_19 : f32 to vector<8x1xf32>
    %25 = arith.divf %23, %24 : vector<8x1xf32>
    %26 = vector.broadcast %25 : vector<8x1xf32> to vector<8x128xf32>
    %27 = arith.subf %21, %26 : vector<8x128xf32>
    %28 = arith.mulf %27, %27 : vector<8x128xf32>
    %cst_20 = arith.constant dense<0.000000e+00> : vector<8xf32>
    %29 = vector.multi_reduction <add>, %28, %cst_20 [1] : vector<8x128xf32> to vector<8xf32>
    %30 = vector.shape_cast %29 : vector<8xf32> to vector<8x1xf32>
    %cst_21 = arith.constant 1.270000e+02 : f32
    %31 = vector.broadcast %cst_21 : f32 to vector<8x1xf32>
    %32 = arith.divf %30, %31 : vector<8x1xf32>
    %33 = math.sqrt %32 : vector<8x1xf32>
    %cst_22 = arith.constant 9.99999997E-7 : f32
    %34 = vector.broadcast %cst_22 : f32 to vector<8x1xf32>
    %35 = arith.addf %33, %34 : vector<8x1xf32>
    %cst_23 = arith.constant 1.000000e+00 : f32
    %36 = vector.broadcast %cst_23 : f32 to vector<8x1xf32>
    %37 = arith.divf %36, %35 : vector<8x1xf32>
    %c0_24 = arith.constant 0 : index
    %c0_25 = arith.constant 0 : index
    %38 = vector.load %arg8[%c0_24, %c0_25] : memref<1x128xf32, #tpu.memory_space<vmem>>, vector<1x128xf32>
    %39 = vector.broadcast %37 : vector<8x1xf32> to vector<8x128xf32>
    %40 = arith.mulf %27, %39 : vector<8x128xf32>
    %41 = vector.broadcast %38 : vector<1x128xf32> to vector<8x128xf32>
    %42 = arith.mulf %41, %40 : vector<8x128xf32>
    %c0_26 = arith.constant 0 : index
    %c0_27 = arith.constant 0 : index
    %43 = vector.load %arg9[%c0_26, %c0_27] : memref<1x128xf32, #tpu.memory_space<vmem>>, vector<1x128xf32>
    %44 = vector.broadcast %43 : vector<1x128xf32> to vector<8x128xf32>
    %45 = arith.addf %42, %44 : vector<8x128xf32>
    %c0_28 = arith.constant 0 : index
    %c0_29 = arith.constant 0 : index
    %46 = vector.load %arg10[%c0_28, %c0_29] : memref<8x128xf32, #tpu.memory_space<vmem>>, vector<8x128xf32>
    tpu.vector_store %arg10[%c0_28, %c0_29], %45 {strides = array<i32>} : memref<8x128xf32, #tpu.memory_space<vmem>>, vector<8x128xf32>,
    return
  }
  func.func @transform_0(%arg0: i32) -> (i32, i32) {
    %c0_i32 = arith.constant 0 : i32
    %c0_i32_0 = arith.constant 0 : i32
    return %arg0, %c0_i32 : i32, i32
  }
  func.func @transform_1(%arg0: i32) -> (i32, i32) {
    %c0_i32 = arith.constant 0 : i32
    %c0_i32_0 = arith.constant 0 : i32
    %c0_i32_1 = arith.constant 0 : i32
    return %c0_i32, %c0_i32_0 : i32, i32
  }
  func.func @transform_2(%arg0: i32) -> (i32, i32) {
    %c0_i32 = arith.constant 0 : i32
    %c0_i32_0 = arith.constant 0 : i32
    %c0_i32_1 = arith.constant 0 : i32
    return %c0_i32, %c0_i32_0 : i32, i32
  }
  func.func @transform_3(%arg0: i32) -> (i32, i32) {
    %c0_i32 = arith.constant 0 : i32
    %c0_i32_0 = arith.constant 0 : i32
    %c0_i32_1 = arith.constant 0 : i32
    return %c0_i32, %c0_i32_0 : i32, i32
  }
  func.func @transform_4(%arg0: i32) -> (i32, i32) {
    %c0_i32 = arith.constant 0 : i32
    %c0_i32_0 = arith.constant 0 : i32
    %c0_i32_1 = arith.constant 0 : i32
    return %c0_i32, %c0_i32_0 : i32, i32
  }
  func.func @transform_5(%arg0: i32) -> (i32, i32) {
    %c0_i32 = arith.constant 0 : i32
    %c0_i32_0 = arith.constant 0 : i32
    %c0_i32_1 = arith.constant 0 : i32
    return %c0_i32, %c0_i32_0 : i32, i32
  }
  func.func @transform_6(%arg0: i32) -> (i32, i32) {
    %c0_i32 = arith.constant 0 : i32
    %c0_i32_0 = arith.constant 0 : i32
    %c0_i32_1 = arith.constant 0 : i32
    return %c0_i32, %c0_i32_0 : i32, i32
  }
  func.func @transform_7(%arg0: i32) -> (i32, i32) {
    %c0_i32 = arith.constant 0 : i32
    %c0_i32_0 = arith.constant 0 : i32
    %c0_i32_1 = arith.constant 0 : i32
    return %c0_i32, %c0_i32_0 : i32, i32
  }
  func.func @transform_8(%arg0: i32) -> (i32, i32) {
    %c0_i32 = arith.constant 0 : i32
    %c0_i32_0 = arith.constant 0 : i32
    %c0_i32_1 = arith.constant 0 : i32
    return %c0_i32, %c0_i32_0 : i32, i32
  }
  func.func @transform_9(%arg0: i32) -> (i32, i32) {
    %c0_i32 = arith.constant 0 : i32
    %c0_i32_0 = arith.constant 0 : i32
    return %arg0, %c0_i32 : i32, i32
  }
}

</mosaic_0001>

<llo_original>
// kernel: tpu_custom_call.1
$region0: #{tpu_custom_call.1}
  #allocation0 [shape = 'u32[]', space=smem, size = 0x4, offset = 0x4, fixed_abs, tag = 'smem constant byte address 0x4 - core index']
  #allocation1 [shape = 'u32[144,128]{1,0:T(1,128)}', space=vmem, size = 0x12000, scoped, tag = 'internal scratch']
  %s0 = inlined_call_operand.hbm [shape: f32[16,256], index: 0, kind: input, shape index: {}]
  %s1 = inlined_call_operand.hbm [shape: f32[256,512], index: 1, kind: input, shape index: {}]
  %s2 = inlined_call_operand.vmem [shape: f32[1,512], index: 2, kind: input, shape index: {}]
  %s3 = inlined_call_operand.hbm [shape: f32[512,256], index: 3, kind: input, shape index: {}]
  %s4 = inlined_call_operand.vmem [shape: f32[1,256], index: 4, kind: input, shape index: {}]
  %s5 = inlined_call_operand.hbm [shape: f32[256,128], index: 5, kind: input, shape index: {}]
  %s6 = inlined_call_operand.vmem [shape: f32[1,128], index: 6, kind: input, shape index: {}]
  %s7 = inlined_call_operand.vmem [shape: f32[1,128], index: 7, kind: input, shape index: {}]
  %s8 = inlined_call_operand.vmem [shape: f32[1,128], index: 8, kind: input, shape index: {}]
  %s9 = inlined_call_operand.hbm [shape: f32[16,128], index: 9, kind: output, shape index: {}]
  %s10 = sld [smem:[#allocation0]]
  $region85: #{tpu_custom_call.1} parent=0
    _
  %s12 = ssub.s32 1, %s10
  %s13 = scalar_select 0, %s12, %s10
  $region1: #{tpu_custom_call.1} parent=0
    #allocation2 [shape = 'u8[16384]{0}', space=vmem, size = 0x4000, scoped, tag = 'input window, operand 0']
    #allocation3 [shape = 's32[2]{0}', space=sflag, size = 0x8, scoped, tag = 'scoped memory for tpu_custom_call.1']
    #allocation4 [shape = 's32[2]{0}', space=sflag, size = 0x8, scoped, tag = 'scoped memory for tpu_custom_call.1']
    #allocation5 [shape = 'u8[524288]{0}', space=vmem, size = 0x80000, scoped, tag = 'input window, operand 1, single buffered']
    #allocation6 [shape = 's32[1]{0}', space=sflag, size = 0x4, scoped, tag = 'scoped memory for tpu_custom_call.1']
    #allocation7 [shape = 'u8[524288]{0}', space=vmem, size = 0x80000, scoped, tag = 'input window, operand 3, single buffered']
    #allocation8 [shape = 'u8[131072]{0}', space=vmem, size = 0x20000, scoped, tag = 'input window, operand 5, single buffered']
    #allocation9 [shape = 's32[1]{0}', space=sflag, size = 0x4, scoped, tag = 'scoped memory for tpu_custom_call.1']
    #allocation10 [shape = 'u8[8192]{0}', space=vmem, size = 0x2000, scoped, tag = 'output window, operand 0']
    %14 = vsyncpa [#allocation3], 0
    %s15 = scalar_lea.sflag [#allocation3], 1
    %16 = vsyncpa %s15, 0
    %17 = vsyncpa [#allocation6], 0
    %18 = vsyncpa [#allocation9], 0
    %19 = vsyncpa [#allocation4], 0
    %s20 = scalar_lea.sflag [#allocation4], 1
    %21 = vsyncpa %s20, 0
    loop: start=0, step=1, limit=4
    $region2: #{tpu_custom_call.1} parent=1 // loop_pre_header
      _
    $region3: #{tpu_custom_call.1} parent=1 // loop_header
      %s23 = sphi 0, %s27
      %p24 = scmp.ge.s32.totalorder %s23, 4
      %s33 = sphi 0, %s35
      %s36 = sphi 0, %s33
      %s37 = sphi 0, %s36
      %s53 = sphi 0, %s37
      %s57 = sphi 0, %s57
      %s59 = sphi 0, %s57
      %s60 = sphi 0, %s59
      %s74 = sphi 0, %s60
      %s78 = sphi 0, %s78
      %s80 = sphi 0, %s78
      %s81 = sphi 0, %s80
      %s95 = sphi 0, %s81
      %s99 = sphi 0, %s99
      %s101 = sphi 0, %s99
      %s102 = sphi 0, %s101
      %s116 = sphi 0, %s102
      %s120 = sphi 0, %s120
      %s122 = sphi 0, %s120
      %s123 = sphi 0, %s122
      %s137 = sphi 0, %s123
      %s141 = sphi 0, %s141
      %s143 = sphi 0, %s141
      %s144 = sphi 0, %s143
      %s158 = sphi 0, %s144
      %s162 = sphi 0, %s162
      %s164 = sphi 0, %s162
      %s165 = sphi 0, %s164
      %s179 = sphi 0, %s165
      %s183 = sphi 0, %s183
      %s185 = sphi 0, %s183
      %s186 = sphi 0, %s185
      %s200 = sphi 0, %s186
      %s204 = sphi 0, %s204
      %s206 = sphi 0, %s204
      %s207 = sphi 0, %s206
      %s221 = sphi 0, %s207
      %s227 = sphi 0, %s229
      %s230 = sphi 0, %s227
      %s231 = sphi 0, %s230
      %s247 = sphi 0, %s231
    $region4: #{tpu_custom_call.1} parent=1 // loop_header_branch
      %26 = sbr.rel (%p24) target = $region8
    $region5: #{tpu_custom_call.1} parent=1 // loop_body
      %s28 = ssub.s32 %s23, 1
      %s29 = ssub.s32 %s23, 2
      %s30 = sadd.s32 %s23, 1
      %s31 = ssub.s32 %s23, %s30
      %p32 = scmp.eq.s32.totalorder %s31, 0
      %s34 = sadd.s32 %s33, 1
      %s35 = scalar_select %p32, %s33, %s34
      %p38 = pneg %p32
      %p39 = scmp.eq.s32.totalorder %s23, 1
      %p40 = por %p38, %p39
      %p41 = scmp.ne.s32.totalorder %s33, %s36
      %p42 = scmp.eq.s32.totalorder %s23, 0
      %p43 = por %p41, %p42
      %p44 = scmp.ne.s32.totalorder %s33, %s36
      %p45 = scmp.eq.s32.totalorder %s28, 1
      %p46 = por %p44, %p45
      %p47 = scmp.ne.s32.totalorder %s36, %s37
      %p48 = scmp.eq.s32.totalorder %s28, 0
      %p49 = por %p47, %p48
      %p50 = scmp.ne.s32.totalorder %s36, %s37
      %p51 = scmp.eq.s32.totalorder %s29, 1
      %p52 = por %p50, %p51
      %p54 = scmp.ne.s32.totalorder %s37, %s53
      %p55 = scmp.eq.s32.totalorder %s29, 0
      %p56 = por %p54, %p55
      %s58 = sadd.s32 %s57, 1
      %p61 = scmp.eq.s32.totalorder %s23, 1
      %p62 = scmp.ne.s32.totalorder %s57, %s59
      %p63 = scmp.eq.s32.totalorder %s23, 0
      %p64 = por %p62, %p63
      %p65 = scmp.ne.s32.totalorder %s57, %s59
      %p66 = scmp.eq.s32.totalorder %s28, 1
      %p67 = por %p65, %p66
      %p68 = scmp.ne.s32.totalorder %s59, %s60
      %p69 = scmp.eq.s32.totalorder %s28, 0
      %p70 = por %p68, %p69
      %p71 = scmp.ne.s32.totalorder %s59, %s60
      %p72 = scmp.eq.s32.totalorder %s29, 1
      %p73 = por %p71, %p72
      %p75 = scmp.ne.s32.totalorder %s60, %s74
      %p76 = scmp.eq.s32.totalorder %s29, 0
      %p77 = por %p75, %p76
      %s79 = sadd.s32 %s78, 1
      %p82 = scmp.eq.s32.totalorder %s23, 1
      %p83 = scmp.ne.s32.totalorder %s78, %s80
      %p84 = scmp.eq.s32.totalorder %s23, 0
      %p85 = por %p83, %p84
      %p86 = scmp.ne.s32.totalorder %s78, %s80
      %p87 = scmp.eq.s32.totalorder %s28, 1
      %p88 = por %p86, %p87
      %p89 = scmp.ne.s32.totalorder %s80, %s81
      %p90 = scmp.eq.s32.totalorder %s28, 0
      %p91 = por %p89, %p90
      %p92 = scmp.ne.s32.totalorder %s80, %s81
      %p93 = scmp.eq.s32.totalorder %s29, 1
      %p94 = por %p92, %p93
      %p96 = scmp.ne.s32.totalorder %s81, %s95
      %p97 = scmp.eq.s32.totalorder %s29, 0
      %p98 = por %p96, %p97
      %s100 = sadd.s32 %s99, 1
      %p103 = scmp.eq.s32.totalorder %s23, 1
      %p104 = scmp.ne.s32.totalorder %s99, %s101
      %p105 = scmp.eq.s32.totalorder %s23, 0
      %p106 = por %p104, %p105
      %p107 = scmp.ne.s32.totalorder %s99, %s101
      %p108 = scmp.eq.s32.totalorder %s28, 1
      %p109 = por %p107, %p108
      %p110 = scmp.ne.s32.totalorder %s101, %s102
      %p111 = scmp.eq.s32.totalorder %s28, 0
      %p112 = por %p110, %p111
      %p113 = scmp.ne.s32.totalorder %s101, %s102
      %p114 = scmp.eq.s32.totalorder %s29, 1
      %p115 = por %p113, %p114
      %p117 = scmp.ne.s32.totalorder %s102, %s116
      %p118 = scmp.eq.s32.totalorder %s29, 0
      %p119 = por %p117, %p118
      %s121 = sadd.s32 %s120, 1
      %p124 = scmp.eq.s32.totalorder %s23, 1
      %p125 = scmp.ne.s32.totalorder %s120, %s122
      %p126 = scmp.eq.s32.totalorder %s23, 0
      %p127 = por %p125, %p126
      %p128 = scmp.ne.s32.totalorder %s120, %s122
      %p129 = scmp.eq.s32.totalorder %s28, 1
      %p130 = por %p128, %p129
      %p131 = scmp.ne.s32.totalorder %s122, %s123
      %p132 = scmp.eq.s32.totalorder %s28, 0
      %p133 = por %p131, %p132
      %p134 = scmp.ne.s32.totalorder %s122, %s123
      %p135 = scmp.eq.s32.totalorder %s29, 1
      %p136 = por %p134, %p135
      %p138 = scmp.ne.s32.totalorder %s123, %s137
      %p139 = scmp.eq.s32.totalorder %s29, 0
      %p140 = por %p138, %p139
      %s142 = sadd.s32 %s141, 1
      %p145 = scmp.eq.s32.totalorder %s23, 1
      %p146 = scmp.ne.s32.totalorder %s141, %s143
      %p147 = scmp.eq.s32.totalorder %s23, 0
      %p148 = por %p146, %p147
      %p149 = scmp.ne.s32.totalorder %s141, %s143
      %p150 = scmp.eq.s32.totalorder %s28, 1
      %p151 = por %p149, %p150
      %p152 = scmp.ne.s32.totalorder %s143, %s144
      %p153 = scmp.eq.s32.totalorder %s28, 0
      %p154 = por %p152, %p153
      %p155 = scmp.ne.s32.totalorder %s143, %s144
      %p156 = scmp.eq.s32.totalorder %s29, 1
      %p157 = por %p155, %p156
      %p159 = scmp.ne.s32.totalorder %s144, %s158
      %p160 = scmp.eq.s32.totalorder %s29, 0
      %p161 = por %p159, %p160
      %s163 = sadd.s32 %s162, 1
      %p166 = scmp.eq.s32.totalorder %s23, 1
      %p167 = scmp.ne.s32.totalorder %s162, %s164
      %p168 = scmp.eq.s32.totalorder %s23, 0
      %p169 = por %p167, %p168
      %p170 = scmp.ne.s32.totalorder %s162, %s164
      %p171 = scmp.eq.s32.totalorder %s28, 1
      %p172 = por %p170, %p171
      %p173 = scmp.ne.s32.totalorder %s164, %s165
      %p174 = scmp.eq.s32.totalorder %s28, 0
      %p175 = por %p173, %p174
      %p176 = scmp.ne.s32.totalorder %s164, %s165
      %p177 = scmp.eq.s32.totalorder %s29, 1
      %p178 = por %p176, %p177
      %p180 = scmp.ne.s32.totalorder %s165, %s179
      %p181 = scmp.eq.s32.totalorder %s29, 0
      %p182 = por %p180, %p181
      %s184 = sadd.s32 %s183, 1
      %p187 = scmp.eq.s32.totalorder %s23, 1
      %p188 = scmp.ne.s32.totalorder %s183, %s185
      %p189 = scmp.eq.s32.totalorder %s23, 0
      %p190 = por %p188, %p189
      %p191 = scmp.ne.s32.totalorder %s183, %s185
      %p192 = scmp.eq.s32.totalorder %s28, 1
      %p193 = por %p191, %p192
      %p194 = scmp.ne.s32.totalorder %s185, %s186
      %p195 = scmp.eq.s32.totalorder %s28, 0
      %p196 = por %p194, %p195
      %p197 = scmp.ne.s32.totalorder %s185, %s186
      %p198 = scmp.eq.s32.totalorder %s29, 1
      %p199 = por %p197, %p198
      %p201 = scmp.ne.s32.totalorder %s186, %s200
      %p202 = scmp.eq.s32.totalorder %s29, 0
      %p203 = por %p201, %p202
      %s205 = sadd.s32 %s204, 1
      %p208 = scmp.eq.s32.totalorder %s23, 1
      %p209 = scmp.ne.s32.totalorder %s204, %s206
      %p210 = scmp.eq.s32.totalorder %s23, 0
      %p211 = por %p209, %p210
      %p212 = scmp.ne.s32.totalorder %s204, %s206
      %p213 = scmp.eq.s32.totalorder %s28, 1
      %p214 = por %p212, %p213
      %p215 = scmp.ne.s32.totalorder %s206, %s207
      %p216 = scmp.eq.s32.totalorder %s28, 0
      %p217 = por %p215, %p216
      %p218 = scmp.ne.s32.totalorder %s206, %s207
      %p219 = scmp.eq.s32.totalorder %s29, 1
      %p220 = por %p218, %p219
      %p222 = scmp.ne.s32.totalorder %s207, %s221
      %p223 = scmp.eq.s32.totalorder %s29, 0
      %p224 = por %p222, %p223
      %s225 = ssub.s32 %s23, %s30
      %p226 = scmp.eq.s32.totalorder %s225, 0
      %s228 = sadd.s32 %s227, 1
      %s229 = scalar_select %p226, %s227, %s228
      %p232 = pneg %p226
      %p233 = scmp.eq.s32.totalorder %s23, 1
      %p234 = por %p232, %p233
      %p235 = scmp.ne.s32.totalorder %s227, %s230
      %p236 = scmp.eq.s32.totalorder %s23, 0
      %p237 = por %p235, %p236
      %p238 = scmp.ne.s32.totalorder %s227, %s230
      %p239 = scmp.eq.s32.totalorder %s28, 1
      %p240 = por %p238, %p239
      %p241 = scmp.ne.s32.totalorder %s230, %s231
      %p242 = scmp.eq.s32.totalorder %s28, 0
      %p243 = por %p241, %p242
      %p244 = scmp.ne.s32.totalorder %s230, %s231
      %p245 = scmp.eq.s32.totalorder %s29, 1
      %p246 = por %p244, %p245
      %p248 = scmp.ne.s32.totalorder %s231, %s247
      %p249 = scmp.eq.s32.totalorder %s29, 0
      %p250 = por %p248, %p249
      %p251 = scmp.le.s32.totalorder 1, %s23
      %p252 = scmp.lt.s32.totalorder %s23, 3
      %p253 = pnand %p251, %p252
      %p254 = pneg %p253
      // Predicated region
      $region9: #{tpu_custom_call.1} parent=5 // pred_check
        _
      $region10: #{tpu_custom_call.1} parent=5 // pred_check_branch
        %256 = sbr.rel (%p253) target = $region12
      $region11: #{tpu_custom_call.1} parent=5 // pred_region
        %s257 = ssub.s32 %s23, 1
        // Predicated region
        $region13: #{tpu_custom_call.1} parent=11 // pred_check
          %p258 = pneg %p70
        $region14: #{tpu_custom_call.1} parent=11 // pred_check_branch
          %260 = sbr.rel (%p258) target = $region16
        $region15: #{tpu_custom_call.1} parent=11 // pred_region
          %s262 = ssub.s32 16384, 16384
          %263 = vsyncadd [#allocation6], %s262
          %s264 = sshll.u32 [#allocation5], 4
          %s265 = int_to_ptr.vmem [resolvable:$true] %s264
          %270 = dma.hbm_to_vmem [thread:$0]  %s1, 16384, %s265, [#allocation6], 512, 512, 32
        $region16: #{tpu_custom_call.1} parent=11 // pred_fallthru
          _
        // Predicated region
        $region17: #{tpu_custom_call.1} parent=11 // pred_check
          %p271 = pneg %p91
        $region18: #{tpu_custom_call.1} parent=11 // pred_check_branch
          %273 = sbr.rel (%p271) target = $region20
        $region19: #{tpu_custom_call.1} parent=11 // pred_region
          _
        $region20: #{tpu_custom_call.1} parent=11 // pred_fallthru
          _
        // Predicated region
        $region21: #{tpu_custom_call.1} parent=11 // pred_check
          %p274 = pneg %p112
        $region22: #{tpu_custom_call.1} parent=11 // pred_check_branch
          %276 = sbr.rel (%p274) target = $region24
        $region23: #{tpu_custom_call.1} parent=11 // pred_region
          %s278 = ssub.s32 16384, 16384
          %279 = vsyncadd [#allocation6], %s278
          %s280 = sshll.u32 [#allocation7], 4
          %s281 = int_to_ptr.vmem [resolvable:$true] %s280
          %286 = dma.hbm_to_vmem [thread:$0]  %s3, 16384, %s281, [#allocation6], 256, 256, 16
        $region24: #{tpu_custom_call.1} parent=11 // pred_fallthru
          _
        // Predicated region
        $region25: #{tpu_custom_call.1} parent=11 // pred_check
          %p287 = pneg %p133
        $region26: #{tpu_custom_call.1} parent=11 // pred_check_branch
          %289 = sbr.rel (%p287) target = $region28
        $region27: #{tpu_custom_call.1} parent=11 // pred_region
          _
        $region28: #{tpu_custom_call.1} parent=11 // pred_fallthru
          _
        // Predicated region
        $region29: #{tpu_custom_call.1} parent=11 // pred_check
          %p290 = pneg %p154
        $region30: #{tpu_custom_call.1} parent=11 // pred_check_branch
          %292 = sbr.rel (%p290) target = $region32
        $region31: #{tpu_custom_call.1} parent=11 // pred_region
          %s294 = ssub.s32 4096, 4096
          %295 = vsyncadd [#allocation9], %s294
          %s296 = sshll.u32 [#allocation8], 4
          %s297 = int_to_ptr.vmem [resolvable:$true] %s296
          %302 = dma.hbm_to_vmem [thread:$0]  %s5, 4096, %s297, [#allocation9], 128, 128, 8
        $region32: #{tpu_custom_call.1} parent=11 // pred_fallthru
          _
        // Predicated region
        $region33: #{tpu_custom_call.1} parent=11 // pred_check
          %p303 = pneg %p175
        $region34: #{tpu_custom_call.1} parent=11 // pred_check_branch
          %305 = sbr.rel (%p303) target = $region36
        $region35: #{tpu_custom_call.1} parent=11 // pred_region
          _
        $region36: #{tpu_custom_call.1} parent=11 // pred_fallthru
          _
        // Predicated region
        $region37: #{tpu_custom_call.1} parent=11 // pred_check
          %p306 = pneg %p196
        $region38: #{tpu_custom_call.1} parent=11 // pred_check_branch
          %308 = sbr.rel (%p306) target = $region40
        $region39: #{tpu_custom_call.1} parent=11 // pred_region
          _
        $region40: #{tpu_custom_call.1} parent=11 // pred_fallthru
          _
        // Predicated region
        $region41: #{tpu_custom_call.1} parent=11 // pred_check
          %p309 = pneg %p217
        $region42: #{tpu_custom_call.1} parent=11 // pred_check_branch
          %311 = sbr.rel (%p309) target = $region44
        $region43: #{tpu_custom_call.1} parent=11 // pred_region
          _
        $region44: #{tpu_custom_call.1} parent=11 // pred_fallthru
          _
      $region12: #{tpu_custom_call.1} parent=5 // pred_fallthru
        _
      %p312 = scmp.lt.s32.totalorder %s23, 2
      // Predicated region
      $region45: #{tpu_custom_call.1} parent=5 // pred_check
        %p313 = pneg %p312
      $region46: #{tpu_custom_call.1} parent=5 // pred_check_branch
        %315 = sbr.rel (%p313) target = $region48
      $region47: #{tpu_custom_call.1} parent=5 // pred_region
        // Predicated region
        $region49: #{tpu_custom_call.1} parent=47 // pred_check
          %p316 = pneg %p43
        $region50: #{tpu_custom_call.1} parent=47 // pred_check_branch
          %318 = sbr.rel (%p316) target = $region52
        $region51: #{tpu_custom_call.1} parent=47 // pred_region
          %s319 = sand.u32 %s33, 1
          %s320 = scalar_lea.sflag [#allocation3], %s319
          %s321 = sand.u32 %s33, 1
          %s322 = smul.addr %s321, 16
          %s323 = scalar_lea.vmem [#allocation2], %s322
          %s325 = ssub.s32 256, 256
          %326 = vsyncadd %s320, %s325
          %s327 = smul.addr %s23, 2
          %s328 = smul.addr %s327, 128
          %s329 = scalar_lea.hbm %s0, %s328
          %s331 = sshll.u32 %s323, 4
          %s332 = int_to_ptr.vmem [resolvable:$true] %s331
          %334 = dma.hbm_to_vmem [thread:$0]  %s329, 256, %s332, %s320
        $region52: #{tpu_custom_call.1} parent=47 // pred_fallthru
          _
      $region48: #{tpu_custom_call.1} parent=5 // pred_fallthru
        _
      %p335 = scmp.le.s32.totalorder 1, %s23
      %p336 = scmp.lt.s32.totalorder %s23, 3
      %p337 = pnand %p335, %p336
      %p338 = pneg %p337
      // Predicated region
      $region53: #{tpu_custom_call.1} parent=5 // pred_check
        _
      $region54: #{tpu_custom_call.1} parent=5 // pred_check_branch
        %340 = sbr.rel (%p337) target = $region56
      $region55: #{tpu_custom_call.1} parent=5 // pred_region
        %s341 = ssub.s32 %s23, 1
        %s342 = sand.u32 %s36, 1
        %s343 = scalar_lea.sflag [#allocation3], %s342
        %s344 = sand.u32 %s36, 1
        %s345 = smul.addr %s344, 16
        %s346 = scalar_lea.vmem [#allocation2], %s345
        // Predicated region
        $region57: #{tpu_custom_call.1} parent=55 // pred_check
          %p347 = pneg %p49
        $region58: #{tpu_custom_call.1} parent=55 // pred_check_branch
          %349 = sbr.rel (%p347) target = $region60
        $region59: #{tpu_custom_call.1} parent=55 // pred_region
          %350 = dma.done %s343, 256
        $region60: #{tpu_custom_call.1} parent=55 // pred_fallthru
          _
        // Predicated region
        $region61: #{tpu_custom_call.1} parent=55 // pred_check
          %p351 = pneg %p70
        $region62: #{tpu_custom_call.1} parent=55 // pred_check_branch
          %353 = sbr.rel (%p351) target = $region64
        $region63: #{tpu_custom_call.1} parent=55 // pred_region
          %354 = dma.done [#allocation6], 16384
        $region64: #{tpu_custom_call.1} parent=55 // pred_fallthru
          _
        // Predicated region
        $region65: #{tpu_custom_call.1} parent=55 // pred_check
          %p355 = pneg %p112
        $region66: #{tpu_custom_call.1} parent=55 // pred_check_branch
          %357 = sbr.rel (%p355) target = $region68
        $region67: #{tpu_custom_call.1} parent=55 // pred_region
          %358 = dma.done [#allocation6], 16384
        $region68: #{tpu_custom_call.1} parent=55 // pred_fallthru
          _
        // Predicated region
        $region69: #{tpu_custom_call.1} parent=55 // pred_check
          %p359 = pneg %p154
        $region70: #{tpu_custom_call.1} parent=55 // pred_check_branch
          %361 = sbr.rel (%p359) target = $region72
        $region71: #{tpu_custom_call.1} parent=55 // pred_region
          %362 = dma.done [#allocation9], 4096
        $region72: #{tpu_custom_call.1} parent=55 // pred_fallthru
          _
        %s363 = sand.u32 %s36, 1
        %s364 = scalar_lea.sflag [#allocation3], %s363
        %s365 = sand.u32 %s36, 1
        %s366 = smul.addr %s365, 16
        %s367 = scalar_lea.vmem [#allocation2], %s366
        %p368 = pneg %p49
        %p369 = pneg %p46
        %p370 = pneg %p70
        %p371 = pneg %p67
        %p372 = pneg %p91
        %p373 = pneg %p88
        %p374 = pneg %p112
        %p375 = pneg %p109
        %p376 = pneg %p133
        %p377 = pneg %p130
        %p378 = pneg %p154
        %p379 = pneg %p151
        %p380 = pneg %p175
        %p381 = pneg %p172
        %p382 = pneg %p196
        %p383 = pneg %p193
        %p384 = pneg %p217
        %p385 = pneg %p214
        %p386 = pneg %p243
        %p387 = pneg %p240
        %s388 = sand.u32 %s230, 1
        %s389 = scalar_lea.sflag [#allocation4], %s388
        %s390 = sand.u32 %s230, 1
        %s391 = smul.addr %s390, 8
        %s392 = scalar_lea.vmem [#allocation10], %s391
        %v393 = vld [vmem:[%s346] sm:$0xff]
        %v394 = vld [vmem:[%s346 + $0x8] sm:$0xff]
        %v395 = vld [vmem:[#allocation5] sm:$0xff]
        %v396 = vld [vmem:[#allocation5 + $0x8] sm:$0xff]
        %v397 = vld [vmem:[#allocation5 + $0x10] sm:$0xff]
        %v398 = vld [vmem:[#allocation5 + $0x18] sm:$0xff]
        %v399 = vld [vmem:[#allocation5 + $0x20] sm:$0xff]
        %v400 = vld [vmem:[#allocation5 + $0x28] sm:$0xff]
        %v401 = vld [vmem:[#allocation5 + $0x30] sm:$0xff]
        %v402 = vld [vmem:[#allocation5 + $0x38] sm:$0xff]
        %v403 = vld [vmem:[#allocation5 + $0x40] sm:$0xff]
        %v404 = vld [vmem:[#allocation5 + $0x48] sm:$0xff]
        %v405 = vld [vmem:[#allocation5 + $0x50] sm:$0xff]
        %v406 = vld [vmem:[#allocation5 + $0x58] sm:$0xff]
        %v407 = vld [vmem:[#allocation5 + $0x60] sm:$0xff]
        %v408 = vld [vmem:[#allocation5 + $0x68] sm:$0xff]
        %v409 = vld [vmem:[#allocation5 + $0x70] sm:$0xff]
        %v410 = vld [vmem:[#allocation5 + $0x78] sm:$0xff]
        %v411 = vld [vmem:[#allocation5 + $0x80] sm:$0xff]
        %v412 = vld [vmem:[#allocation5 + $0x88] sm:$0xff]
        %v413 = vld [vmem:[#allocation5 + $0x90] sm:$0xff]
        %v414 = vld [vmem:[#allocation5 + $0x98] sm:$0xff]
        %v415 = vld [vmem:[#allocation5 + $0xa0] sm:$0xff]
        %v416 = vld [vmem:[#allocation5 + $0xa8] sm:$0xff]
        %v417 = vld [vmem:[#allocation5 + $0xb0] sm:$0xff]
        %v418 = vld [vmem:[#allocation5 + $0xb8] sm:$0xff]
        %v419 = vld [vmem:[#allocation5 + $0xc0] sm:$0xff]
        %v420 = vld [vmem:[#allocation5 + $0xc8] sm:$0xff]
        %v421 = vld [vmem:[#allocation5 + $0xd0] sm:$0xff]
        %v422 = vld [vmem:[#allocation5 + $0xd8] sm:$0xff]
        %v423 = vld [vmem:[#allocation5 + $0xe0] sm:$0xff]
        %v424 = vld [vmem:[#allocation5 + $0xe8] sm:$0xff]
        %v425 = vld [vmem:[#allocation5 + $0xf0] sm:$0xff]
        %v426 = vld [vmem:[#allocation5 + $0xf8] sm:$0xff]
        %v427 = vld [vmem:[#allocation5 + $0x100] sm:$0xff]
        %v428 = vld [vmem:[#allocation5 + $0x108] sm:$0xff]
        %v429 = vld [vmem:[#allocation5 + $0x110] sm:$0xff]
        %v430 = vld [vmem:[#allocation5 + $0x118] sm:$0xff]
        %v431 = vld [vmem:[#allocation5 + $0x120] sm:$0xff]
        %v432 = vld [vmem:[#allocation5 + $0x128] sm:$0xff]
        %v433 = vld [vmem:[#allocation5 + $0x130] sm:$0xff]
        %v434 = vld [vmem:[#allocation5 + $0x138] sm:$0xff]
        %v435 = vld [vmem:[#allocation5 + $0x140] sm:$0xff]
        %v436 = vld [vmem:[#allocation5 + $0x148] sm:$0xff]
        %v437 = vld [vmem:[#allocation5 + $0x150] sm:$0xff]
        %v438 = vld [vmem:[#allocation5 + $0x158] sm:$0xff]
        %v439 = vld [vmem:[#allocation5 + $0x160] sm:$0xff]
        %v440 = vld [vmem:[#allocation5 + $0x168] sm:$0xff]
        %v441 = vld [vmem:[#allocation5 + $0x170] sm:$0xff]
        %v442 = vld [vmem:[#allocation5 + $0x178] sm:$0xff]
        %v443 = vld [vmem:[#allocation5 + $0x180] sm:$0xff]
        %v444 = vld [vmem:[#allocation5 + $0x188] sm:$0xff]
        %v445 = vld [vmem:[#allocation5 + $0x190] sm:$0xff]
        %v446 = vld [vmem:[#allocation5 + $0x198] sm:$0xff]
        %v447 = vld [vmem:[#allocation5 + $0x1a0] sm:$0xff]
        %v448 = vld [vmem:[#allocation5 + $0x1a8] sm:$0xff]
        %v449 = vld [vmem:[#allocation5 + $0x1b0] sm:$0xff]
        %v450 = vld [vmem:[#allocation5 + $0x1b8] sm:$0xff]
        %v451 = vld [vmem:[#allocation5 + $0x1c0] sm:$0xff]
        %v452 = vld [vmem:[#allocation5 + $0x1c8] sm:$0xff]
        %v453 = vld [vmem:[#allocation5 + $0x1d0] sm:$0xff]
        %v454 = vld [vmem:[#allocation5 + $0x1d8] sm:$0xff]
        %v455 = vld [vmem:[#allocation5 + $0x1e0] sm:$0xff]
        %v456 = vld [vmem:[#allocation5 + $0x1e8] sm:$0xff]
        %v457 = vld [vmem:[#allocation5 + $0x1f0] sm:$0xff]
        %v458 = vld [vmem:[#allocation5 + $0x1f8] sm:$0xff]
        %v459 = vld [vmem:[#allocation5 + $0x200] sm:$0xff]
        %v460 = vld [vmem:[#allocation5 + $0x208] sm:$0xff]
        %v461 = vld [vmem:[#allocation5 + $0x210] sm:$0xff]
        %v462 = vld [vmem:[#allocation5 + $0x218] sm:$0xff]
        %v463 = vld [vmem:[#allocation5 + $0x220] sm:$0xff]
        %v464 = vld [vmem:[#allocation5 + $0x228] sm:$0xff]
        %v465 = vld [vmem:[#allocation5 + $0x230] sm:$0xff]
        %v466 = vld [vmem:[#allocation5 + $0x238] sm:$0xff]
        %v467 = vld [vmem:[#allocation5 + $0x240] sm:$0xff]
        %v468 = vld [vmem:[#allocation5 + $0x248] sm:$0xff]
        %v469 = vld [vmem:[#allocation5 + $0x250] sm:$0xff]
        %v470 = vld [vmem:[#allocation5 + $0x258] sm:$0xff]
        %v471 = vld [vmem:[#allocation5 + $0x260] sm:$0xff]
        %v472 = vld [vmem:[#allocation5 + $0x268] sm:$0xff]
        %v473 = vld [vmem:[#allocation5 + $0x270] sm:$0xff]
        %v474 = vld [vmem:[#allocation5 + $0x278] sm:$0xff]
        %v475 = vld [vmem:[#allocation5 + $0x280] sm:$0xff]
        %v476 = vld [vmem:[#allocation5 + $0x288] sm:$0xff]
        %v477 = vld [vmem:[#allocation5 + $0x290] sm:$0xff]
        %v478 = vld [vmem:[#allocation5 + $0x298] sm:$0xff]
        %v479 = vld [vmem:[#allocation5 + $0x2a0] sm:$0xff]
        %v480 = vld [vmem:[#allocation5 + $0x2a8] sm:$0xff]
        %v481 = vld [vmem:[#allocation5 + $0x2b0] sm:$0xff]
        %v482 = vld [vmem:[#allocation5 + $0x2b8] sm:$0xff]
        %v483 = vld [vmem:[#allocation5 + $0x2c0] sm:$0xff]
        %v484 = vld [vmem:[#allocation5 + $0x2c8] sm:$0xff]
        %v485 = vld [vmem:[#allocation5 + $0x2d0] sm:$0xff]
        %v486 = vld [vmem:[#allocation5 + $0x2d8] sm:$0xff]
        %v487 = vld [vmem:[#allocation5 + $0x2e0] sm:$0xff]
        %v488 = vld [vmem:[#allocation5 + $0x2e8] sm:$0xff]
        %v489 = vld [vmem:[#allocation5 + $0x2f0] sm:$0xff]
        %v490 = vld [vmem:[#allocation5 + $0x2f8] sm:$0xff]
        %v491 = vld [vmem:[#allocation5 + $0x300] sm:$0xff]
        %v492 = vld [vmem:[#allocation5 + $0x308] sm:$0xff]
        %v493 = vld [vmem:[#allocation5 + $0x310] sm:$0xff]
        %v494 = vld [vmem:[#allocation5 + $0x318] sm:$0xff]
        %v495 = vld [vmem:[#allocation5 + $0x320] sm:$0xff]
        %v496 = vld [vmem:[#allocation5 + $0x328] sm:$0xff]
        %v497 = vld [vmem:[#allocation5 + $0x330] sm:$0xff]
        %v498 = vld [vmem:[#allocation5 + $0x338] sm:$0xff]
        %v499 = vld [vmem:[#allocation5 + $0x340] sm:$0xff]
        %v500 = vld [vmem:[#allocation5 + $0x348] sm:$0xff]
        %v501 = vld [vmem:[#allocation5 + $0x350] sm:$0xff]
        %v502 = vld [vmem:[#allocation5 + $0x358] sm:$0xff]
        %v503 = vld [vmem:[#allocation5 + $0x360] sm:$0xff]
        %v504 = vld [vmem:[#allocation5 + $0x368] sm:$0xff]
        %v505 = vld [vmem:[#allocation5 + $0x370] sm:$0xff]
        %v506 = vld [vmem:[#allocation5 + $0x378] sm:$0xff]
        %v507 = vld [vmem:[#allocation5 + $0x380] sm:$0xff]
        %v508 = vld [vmem:[#allocation5 + $0x388] sm:$0xff]
        %v509 = vld [vmem:[#allocation5 + $0x390] sm:$0xff]
        %v510 = vld [vmem:[#allocation5 + $0x398] sm:$0xff]
        %v511 = vld [vmem:[#allocation5 + $0x3a0] sm:$0xff]
        %v512 = vld [vmem:[#allocation5 + $0x3a8] sm:$0xff]
        %v513 = vld [vmem:[#allocation5 + $0x3b0] sm:$0xff]
        %v514 = vld [vmem:[#allocation5 + $0x3b8] sm:$0xff]
        %v515 = vld [vmem:[#allocation5 + $0x3c0] sm:$0xff]
        %v516 = vld [vmem:[#allocation5 + $0x3c8] sm:$0xff]
        %v517 = vld [vmem:[#allocation5 + $0x3d0] sm:$0xff]
        %v518 = vld [vmem:[#allocation5 + $0x3d8] sm:$0xff]
        %v519 = vld [vmem:[#allocation5 + $0x3e0] sm:$0xff]
        %v520 = vld [vmem:[#allocation5 + $0x3e8] sm:$0xff]
        %v521 = vld [vmem:[#allocation5 + $0x3f0] sm:$0xff]
        %v522 = vld [vmem:[#allocation5 + $0x3f8] sm:$0xff]
        %v523 = vld [vmem:[%s2] sm:$0xf]
        %v525 = vlaneseq
        %v526 = vshrl.u32 %v525, 7
        %v527 = vsub.s32 0, %v526
        %v528 = vrot.slane %v523, %v527
        %v529 = vlaneseq
        %v530 = vshrl.u32 %v529, 7
        %v531 = vsub.s32 1, %v530
        %v532 = vrot.slane %v523, %v531
        %v533 = vlaneseq
        %v534 = vshrl.u32 %v533, 7
        %v535 = vsub.s32 2, %v534
        %v536 = vrot.slane %v523, %v535
        %v537 = vlaneseq
        %v538 = vshrl.u32 %v537, 7
        %v539 = vsub.s32 3, %v538
        %v540 = vrot.slane %v523, %v539
        %545 = vmatprep.subr.mxu0 %v396
        %546 = vmatpush1.msra.mxu0 %v395
        %547 = vmatprep.subr.mxu0 %v400
        %548 = vmatpush1.msra.mxu0 %v399
        %549 = vmatprep.subr.mxu0 %v404
        %550 = vmatpush1.msra.mxu0 %v403
        %551 = vmatprep.subr.mxu0 %v408
        %552 = vmatpush1.msra.mxu0 %v407
        %553 = vmatprep.subr.mxu0 %v412
        %554 = vmatpush1.msra.mxu0 %v411
        %555 = vmatprep.subr.mxu0 %v416
        %556 = vmatpush1.msra.mxu0 %v415
        %557 = vmatprep.subr.mxu0 %v420
        %558 = vmatpush1.msra.mxu0 %v419
        %559 = vmatprep.subr.mxu0 %v424
        %560 = vmatpush1.msra.mxu0 %v423
        %561 = vmatprep.subr.mxu0 %v428
        %562 = vmatpush1.msra.mxu0 %v427
        %563 = vmatprep.subr.mxu0 %v432
        %564 = vmatpush1.msra.mxu0 %v431
        %565 = vmatprep.subr.mxu0 %v436
        %566 = vmatpush1.msra.mxu0 %v435
        %567 = vmatprep.subr.mxu0 %v440
        %568 = vmatpush1.msra.mxu0 %v439
        %569 = vmatprep.subr.mxu0 %v444
        %570 = vmatpush1.msra.mxu0 %v443
        %571 = vmatprep.subr.mxu0 %v448
        %572 = vmatpush1.msra.mxu0 %v447
        %573 = vmatprep.subr.mxu0 %v452
        %574 = vmatpush1.msra.mxu0 %v451
        %575 = vmatprep.subr.mxu0 %v456
        %576 = vmatpush1.msra.mxu0 %v455
        %577 = vmatprep.subr.mxu0 %v460
        %578 = vmatpush1.msra.mxu0 %v459
        %579 = vmatprep.subr.mxu0 %v464
        %580 = vmatpush1.msra.mxu0 %v463
        %581 = vmatprep.subr.mxu0 %v468
        %582 = vmatpush1.msra.mxu0 %v467
        %583 = vmatprep.subr.mxu0 %v472
        %584 = vmatpush1.msra.mxu0 %v471
        %585 = vmatprep.subr.mxu0 %v476
        %586 = vmatpush1.msra.mxu0 %v475
        %587 = vmatprep.subr.mxu0 %v480
        %588 = vmatpush1.msra.mxu0 %v479
        %589 = vmatprep.subr.mxu0 %v484
        %590 = vmatpush1.msra.mxu0 %v483
        %591 = vmatprep.subr.mxu0 %v488
        %592 = vmatpush1.msra.mxu0 %v487
        %593 = vmatprep.subr.mxu0 %v492
        %594 = vmatpush1.msra.mxu0 %v491
        %595 = vmatprep.subr.mxu0 %v496
        %596 = vmatpush1.msra.mxu0 %v495
        %597 = vmatprep.subr.mxu0 %v500
        %598 = vmatpush1.msra.mxu0 %v499
        %599 = vmatprep.subr.mxu0 %v504
        %600 = vmatpush1.msra.mxu0 %v503
        %601 = vmatprep.subr.mxu0 %v508
        %602 = vmatpush1.msra.mxu0 %v507
        %603 = vmatprep.subr.mxu0 %v512
        %604 = vmatpush1.msra.mxu0 %v511
        %605 = vmatprep.subr.mxu0 %v516
        %606 = vmatpush1.msra.mxu0 %v515
        %607 = vmatprep.subr.mxu0 %v520
        %608 = vmatpush1.msra.mxu0 %v519
        %609 = vmatprep.mubr.f32.mxu0 %v394
        %610 = vmatmul.mubr.f32.gmra.mrb[0].mxu0 %v393
        %v611 = vpop.f32.mrb[0].mxu0
        %v612 = vadd.f32 %v528, %v611
        %v613 = vpop.f32.mrb[0].mxu0
        %v614 = vadd.f32 %v532, %v613
        %615 = vdwg.mxu0
        %616 = vmatprep.subr.mxu0 %v398
        %617 = vmatpush1.msra.mxu0 %v397
        %618 = vmatprep.subr.mxu0 %v402
        %619 = vmatpush1.msra.mxu0 %v401
        %620 = vmatprep.subr.mxu0 %v406
        %621 = vmatpush1.msra.mxu0 %v405
        %622 = vmatprep.subr.mxu0 %v410
        %623 = vmatpush1.msra.mxu0 %v409
        %624 = vmatprep.subr.mxu0 %v414
        %625 = vmatpush1.msra.mxu0 %v413
        %626 = vmatprep.subr.mxu0 %v418
        %627 = vmatpush1.msra.mxu0 %v417
        %628 = vmatprep.subr.mxu0 %v422
        %629 = vmatpush1.msra.mxu0 %v421
        %630 = vmatprep.subr.mxu0 %v426
        %631 = vmatpush1.msra.mxu0 %v425
        %632 = vmatprep.subr.mxu0 %v430
        %633 = vmatpush1.msra.mxu0 %v429
        %634 = vmatprep.subr.mxu0 %v434
        %635 = vmatpush1.msra.mxu0 %v433
        %636 = vmatprep.subr.mxu0 %v438
        %637 = vmatpush1.msra.mxu0 %v437
        %638 = vmatprep.subr.mxu0 %v442
        %639 = vmatpush1.msra.mxu0 %v441
        %640 = vmatprep.subr.mxu0 %v446
        %641 = vmatpush1.msra.mxu0 %v445
        %642 = vmatprep.subr.mxu0 %v450
        %643 = vmatpush1.msra.mxu0 %v449
        %644 = vmatprep.subr.mxu0 %v454
        %645 = vmatpush1.msra.mxu0 %v453
        %646 = vmatprep.subr.mxu0 %v458
        %647 = vmatpush1.msra.mxu0 %v457
        %648 = vmatprep.subr.mxu0 %v462
        %649 = vmatpush1.msra.mxu0 %v461
        %650 = vmatprep.subr.mxu0 %v466
        %651 = vmatpush1.msra.mxu0 %v465
        %652 = vmatprep.subr.mxu0 %v470
        %653 = vmatpush1.msra.mxu0 %v469
        %654 = vmatprep.subr.mxu0 %v474
        %655 = vmatpush1.msra.mxu0 %v473
        %656 = vmatprep.subr.mxu0 %v478
        %657 = vmatpush1.msra.mxu0 %v477
        %658 = vmatprep.subr.mxu0 %v482
        %659 = vmatpush1.msra.mxu0 %v481
        %660 = vmatprep.subr.mxu0 %v486
        %661 = vmatpush1.msra.mxu0 %v485
        %662 = vmatprep.subr.mxu0 %v490
        %663 = vmatpush1.msra.mxu0 %v489
        %664 = vmatprep.subr.mxu0 %v494
        %665 = vmatpush1.msra.mxu0 %v493
        %666 = vmatprep.subr.mxu0 %v498
        %667 = vmatpush1.msra.mxu0 %v497
        %668 = vmatprep.subr.mxu0 %v502
        %669 = vmatpush1.msra.mxu0 %v501
        %670 = vmatprep.subr.mxu0 %v506
        %671 = vmatpush1.msra.mxu0 %v505
        %672 = vmatprep.subr.mxu0 %v510
        %673 = vmatpush1.msra.mxu0 %v509
        %674 = vmatprep.subr.mxu0 %v514
        %675 = vmatpush1.msra.mxu0 %v513
        %676 = vmatprep.subr.mxu0 %v518
        %677 = vmatpush1.msra.mxu0 %v517
        %678 = vmatprep.subr.mxu0 %v522
        %679 = vmatpush1.msra.mxu0 %v521
        %680 = vmatprep.mubr.f32.mxu0 %v394
        %681 = vmatmul.mubr.f32.gmra.mrb[0].mxu0 %v393
        %v682 = vpop.f32.mrb[0].mxu0
        %v683 = vadd.f32 %v536, %v682
        %v684 = vpop.f32.mrb[0].mxu0
        %v685 = vadd.f32 %v540, %v684
        %686 = vdwg.mxu0
        %v687 = vmax.f32 %v612, 0.0
        %v688 = vmax.f32 %v614, 0.0
        %v689 = vmax.f32 %v683, 0.0
        %v690 = vmax.f32 %v685, 0.0
        %v691 = vld [vmem:[#allocation7] sm:$0xff]
        %v692 = vld [vmem:[#allocation7 + $0x8] sm:$0xff]
        %v693 = vld [vmem:[#allocation7 + $0x10] sm:$0xff]
        %v694 = vld [vmem:[#allocation7 + $0x18] sm:$0xff]
        %v695 = vld [vmem:[#allocation7 + $0x20] sm:$0xff]
        %v696 = vld [vmem:[#allocation7 + $0x28] sm:$0xff]
        %v697 = vld [vmem:[#allocation7 + $0x30] sm:$0xff]
        %v698 = vld [vmem:[#allocation7 + $0x38] sm:$0xff]
        %v699 = vld [vmem:[#allocation7 + $0x40] sm:$0xff]
        %v700 = vld [vmem:[#allocation7 + $0x48] sm:$0xff]
        %v701 = vld [vmem:[#allocation7 + $0x50] sm:$0xff]
        %v702 = vld [vmem:[#allocation7 + $0x58] sm:$0xff]
        %v703 = vld [vmem:[#allocation7 + $0x60] sm:$0xff]
        %v704 = vld [vmem:[#allocation7 + $0x68] sm:$0xff]
        %v705 = vld [vmem:[#allocation7 + $0x70] sm:$0xff]
        %v706 = vld [vmem:[#allocation7 + $0x78] sm:$0xff]
        %v707 = vld [vmem:[#allocation7 + $0x80] sm:$0xff]
        %v708 = vld [vmem:[#allocation7 + $0x88] sm:$0xff]
        %v709 = vld [vmem:[#allocation7 + $0x90] sm:$0xff]
        %v710 = vld [vmem:[#allocation7 + $0x98] sm:$0xff]
        %v711 = vld [vmem:[#allocation7 + $0xa0] sm:$0xff]
        %v712 = vld [vmem:[#allocation7 + $0xa8] sm:$0xff]
        %v713 = vld [vmem:[#allocation7 + $0xb0] sm:$0xff]
        %v714 = vld [vmem:[#allocation7 + $0xb8] sm:$0xff]
        %v715 = vld [vmem:[#allocation7 + $0xc0] sm:$0xff]
        %v716 = vld [vmem:[#allocation7 + $0xc8] sm:$0xff]
        %v717 = vld [vmem:[#allocation7 + $0xd0] sm:$0xff]
        %v718 = vld [vmem:[#allocation7 + $0xd8] sm:$0xff]
        %v719 = vld [vmem:[#allocation7 + $0xe0] sm:$0xff]
        %v720 = vld [vmem:[#allocation7 + $0xe8] sm:$0xff]
        %v721 = vld [vmem:[#allocation7 + $0xf0] sm:$0xff]
        %v722 = vld [vmem:[#allocation7 + $0xf8] sm:$0xff]
        %v723 = vld [vmem:[#allocation7 + $0x100] sm:$0xff]
        %v724 = vld [vmem:[#allocation7 + $0x108] sm:$0xff]
        %v725 = vld [vmem:[#allocation7 + $0x110] sm:$0xff]
        %v726 = vld [vmem:[#allocation7 + $0x118] sm:$0xff]
        %v727 = vld [vmem:[#allocation7 + $0x120] sm:$0xff]
        %v728 = vld [vmem:[#allocation7 + $0x128] sm:$0xff]
        %v729 = vld [vmem:[#allocation7 + $0x130] sm:$0xff]
        %v730 = vld [vmem:[#allocation7 + $0x138] sm:$0xff]
        %v731 = vld [vmem:[#allocation7 + $0x140] sm:$0xff]
        %v732 = vld [vmem:[#allocation7 + $0x148] sm:$0xff]
        %v733 = vld [vmem:[#allocation7 + $0x150] sm:$0xff]
        %v734 = vld [vmem:[#allocation7 + $0x158] sm:$0xff]
        %v735 = vld [vmem:[#allocation7 + $0x160] sm:$0xff]
        %v736 = vld [vmem:[#allocation7 + $0x168] sm:$0xff]
        %v737 = vld [vmem:[#allocation7 + $0x170] sm:$0xff]
        %v738 = vld [vmem:[#allocation7 + $0x178] sm:$0xff]
        %v739 = vld [vmem:[#allocation7 + $0x180] sm:$0xff]
        %v740 = vld [vmem:[#allocation7 + $0x188] sm:$0xff]
        %v741 = vld [vmem:[#allocation7 + $0x190] sm:$0xff]
        %v742 = vld [vmem:[#allocation7 + $0x198] sm:$0xff]
        %v743 = vld [vmem:[#allocation7 + $0x1a0] sm:$0xff]
        %v744 = vld [vmem:[#allocation7 + $0x1a8] sm:$0xff]
        %v745 = vld [vmem:[#allocation7 + $0x1b0] sm:$0xff]
        %v746 = vld [vmem:[#allocation7 + $0x1b8] sm:$0xff]
        %v747 = vld [vmem:[#allocation7 + $0x1c0] sm:$0xff]
        %v748 = vld [vmem:[#allocation7 + $0x1c8] sm:$0xff]
        %v749 = vld [vmem:[#allocation7 + $0x1d0] sm:$0xff]
        %v750 = vld [vmem:[#allocation7 + $0x1d8] sm:$0xff]
        %v751 = vld [vmem:[#allocation7 + $0x1e0] sm:$0xff]
        %v752 = vld [vmem:[#allocation7 + $0x1e8] sm:$0xff]
        %v753 = vld [vmem:[#allocation7 + $0x1f0] sm:$0xff]
        %v754 = vld [vmem:[#allocation7 + $0x1f8] sm:$0xff]
        %v755 = vld [vmem:[#allocation7 + $0x200] sm:$0xff]
        %v756 = vld [vmem:[#allocation7 + $0x208] sm:$0xff]
        %v757 = vld [vmem:[#allocation7 + $0x210] sm:$0xff]
        %v758 = vld [vmem:[#allocation7 + $0x218] sm:$0xff]
        %v759 = vld [vmem:[#allocation7 + $0x220] sm:$0xff]
        %v760 = vld [vmem:[#allocation7 + $0x228] sm:$0xff]
        %v761 = vld [vmem:[#allocation7 + $0x230] sm:$0xff]
        %v762 = vld [vmem:[#allocation7 + $0x238] sm:$0xff]
        %v763 = vld [vmem:[#allocation7 + $0x240] sm:$0xff]
        %v764 = vld [vmem:[#allocation7 + $0x248] sm:$0xff]
        %v765 = vld [vmem:[#allocation7 + $0x250] sm:$0xff]
        %v766 = vld [vmem:[#allocation7 + $0x258] sm:$0xff]
        %v767 = vld [vmem:[#allocation7 + $0x260] sm:$0xff]
        %v768 = vld [vmem:[#allocation7 + $0x268] sm:$0xff]
        %v769 = vld [vmem:[#allocation7 + $0x270] sm:$0xff]
        %v770 = vld [vmem:[#allocation7 + $0x278] sm:$0xff]
        %v771 = vld [vmem:[#allocation7 + $0x280] sm:$0xff]
        %v772 = vld [vmem:[#allocation7 + $0x288] sm:$0xff]
        %v773 = vld [vmem:[#allocation7 + $0x290] sm:$0xff]
        %v774 = vld [vmem:[#allocation7 + $0x298] sm:$0xff]
        %v775 = vld [vmem:[#allocation7 + $0x2a0] sm:$0xff]
        %v776 = vld [vmem:[#allocation7 + $0x2a8] sm:$0xff]
        %v777 = vld [vmem:[#allocation7 + $0x2b0] sm:$0xff]
        %v778 = vld [vmem:[#allocation7 + $0x2b8] sm:$0xff]
        %v779 = vld [vmem:[#allocation7 + $0x2c0] sm:$0xff]
        %v780 = vld [vmem:[#allocation7 + $0x2c8] sm:$0xff]
        %v781 = vld [vmem:[#allocation7 + $0x2d0] sm:$0xff]
        %v782 = vld [vmem:[#allocation7 + $0x2d8] sm:$0xff]
        %v783 = vld [vmem:[#allocation7 + $0x2e0] sm:$0xff]
        %v784 = vld [vmem:[#allocation7 + $0x2e8] sm:$0xff]
        %v785 = vld [vmem:[#allocation7 + $0x2f0] sm:$0xff]
        %v786 = vld [vmem:[#allocation7 + $0x2f8] sm:$0xff]
        %v787 = vld [vmem:[#allocation7 + $0x300] sm:$0xff]
        %v788 = vld [vmem:[#allocation7 + $0x308] sm:$0xff]
        %v789 = vld [vmem:[#allocation7 + $0x310] sm:$0xff]
        %v790 = vld [vmem:[#allocation7 + $0x318] sm:$0xff]
        %v791 = vld [vmem:[#allocation7 + $0x320] sm:$0xff]
        %v792 = vld [vmem:[#allocation7 + $0x328] sm:$0xff]
        %v793 = vld [vmem:[#allocation7 + $0x330] sm:$0xff]
        %v794 = vld [vmem:[#allocation7 + $0x338] sm:$0xff]
        %v795 = vld [vmem:[#allocation7 + $0x340] sm:$0xff]
        %v796 = vld [vmem:[#allocation7 + $0x348] sm:$0xff]
        %v797 = vld [vmem:[#allocation7 + $0x350] sm:$0xff]
        %v798 = vld [vmem:[#allocation7 + $0x358] sm:$0xff]
        %v799 = vld [vmem:[#allocation7 + $0x360] sm:$0xff]
        %v800 = vld [vmem:[#allocation7 + $0x368] sm:$0xff]
        %v801 = vld [vmem:[#allocation7 + $0x370] sm:$0xff]
        %v802 = vld [vmem:[#allocation7 + $0x378] sm:$0xff]
        %v803 = vld [vmem:[#allocation7 + $0x380] sm:$0xff]
        %v804 = vld [vmem:[#allocation7 + $0x388] sm:$0xff]
        %v805 = vld [vmem:[#allocation7 + $0x390] sm:$0xff]
        %v806 = vld [vmem:[#allocation7 + $0x398] sm:$0xff]
        %v807 = vld [vmem:[#allocation7 + $0x3a0] sm:$0xff]
        %v808 = vld [vmem:[#allocation7 + $0x3a8] sm:$0xff]
        %v809 = vld [vmem:[#allocation7 + $0x3b0] sm:$0xff]
        %v810 = vld [vmem:[#allocation7 + $0x3b8] sm:$0xff]
        %v811 = vld [vmem:[#allocation7 + $0x3c0] sm:$0xff]
        %v812 = vld [vmem:[#allocation7 + $0x3c8] sm:$0xff]
        %v813 = vld [vmem:[#allocation7 + $0x3d0] sm:$0xff]
        %v814 = vld [vmem:[#allocation7 + $0x3d8] sm:$0xff]
        %v815 = vld [vmem:[#allocation7 + $0x3e0] sm:$0xff]
        %v816 = vld [vmem:[#allocation7 + $0x3e8] sm:$0xff]
        %v817 = vld [vmem:[#allocation7 + $0x3f0] sm:$0xff]
        %v818 = vld [vmem:[#allocation7 + $0x3f8] sm:$0xff]
        %v819 = vld [vmem:[%s4] sm:$0x3]
        %v821 = vlaneseq
        %v822 = vshrl.u32 %v821, 7
        %v823 = vsub.s32 0, %v822
        %v824 = vrot.slane %v819, %v823
        %v825 = vlaneseq
        %v826 = vshrl.u32 %v825, 7
        %v827 = vsub.s32 1, %v826
        %v828 = vrot.slane %v819, %v827
        %831 = vmatprep.subr.mxu0 %v692
        %832 = vmatpush1.msra.mxu0 %v691
        %833 = vmatprep.subr.mxu0 %v694
        %834 = vmatpush1.msra.mxu0 %v693
        %835 = vmatprep.subr.mxu0 %v696
        %836 = vmatpush1.msra.mxu0 %v695
        %837 = vmatprep.subr.mxu0 %v698
        %838 = vmatpush1.msra.mxu0 %v697
        %839 = vmatprep.subr.mxu0 %v700
        %840 = vmatpush1.msra.mxu0 %v699
        %841 = vmatprep.subr.mxu0 %v702
        %842 = vmatpush1.msra.mxu0 %v701
        %843 = vmatprep.subr.mxu0 %v704
        %844 = vmatpush1.msra.mxu0 %v703
        %845 = vmatprep.subr.mxu0 %v706
        %846 = vmatpush1.msra.mxu0 %v705
        %847 = vmatprep.subr.mxu0 %v708
        %848 = vmatpush1.msra.mxu0 %v707
        %849 = vmatprep.subr.mxu0 %v710
        %850 = vmatpush1.msra.mxu0 %v709
        %851 = vmatprep.subr.mxu0 %v712
        %852 = vmatpush1.msra.mxu0 %v711
        %853 = vmatprep.subr.mxu0 %v714
        %854 = vmatpush1.msra.mxu0 %v713
        %855 = vmatprep.subr.mxu0 %v716
        %856 = vmatpush1.msra.mxu0 %v715
        %857 = vmatprep.subr.mxu0 %v718
        %858 = vmatpush1.msra.mxu0 %v717
        %859 = vmatprep.subr.mxu0 %v720
        %860 = vmatpush1.msra.mxu0 %v719
        %861 = vmatprep.subr.mxu0 %v722
        %862 = vmatpush1.msra.mxu0 %v721
        %863 = vmatprep.subr.mxu0 %v724
        %864 = vmatpush1.msra.mxu0 %v723
        %865 = vmatprep.subr.mxu0 %v726
        %866 = vmatpush1.msra.mxu0 %v725
        %867 = vmatprep.subr.mxu0 %v728
        %868 = vmatpush1.msra.mxu0 %v727
        %869 = vmatprep.subr.mxu0 %v730
        %870 = vmatpush1.msra.mxu0 %v729
        %871 = vmatprep.subr.mxu0 %v732
        %872 = vmatpush1.msra.mxu0 %v731
        %873 = vmatprep.subr.mxu0 %v734
        %874 = vmatpush1.msra.mxu0 %v733
        %875 = vmatprep.subr.mxu0 %v736
        %876 = vmatpush1.msra.mxu0 %v735
        %877 = vmatprep.subr.mxu0 %v738
        %878 = vmatpush1.msra.mxu0 %v737
        %879 = vmatprep.subr.mxu0 %v740
        %880 = vmatpush1.msra.mxu0 %v739
        %881 = vmatprep.subr.mxu0 %v742
        %882 = vmatpush1.msra.mxu0 %v741
        %883 = vmatprep.subr.mxu0 %v744
        %884 = vmatpush1.msra.mxu0 %v743
        %885 = vmatprep.subr.mxu0 %v746
        %886 = vmatpush1.msra.mxu0 %v745
        %887 = vmatprep.subr.mxu0 %v748
        %888 = vmatpush1.msra.mxu0 %v747
        %889 = vmatprep.subr.mxu0 %v750
        %890 = vmatpush1.msra.mxu0 %v749
        %891 = vmatprep.subr.mxu0 %v752
        %892 = vmatpush1.msra.mxu0 %v751
        %893 = vmatprep.subr.mxu0 %v754
        %894 = vmatpush1.msra.mxu0 %v753
        %895 = vmatprep.mubr.f32.mxu0 %v688
        %896 = vmatmul.mubr.f32.gmra.mrb[0].mxu0 %v687
        %v897 = vpop.f32.mrb[0].mxu0
        %v898 = vadd.f32 %v824, %v897
        %v899 = vpop.f32.mrb[0].mxu0
        %v900 = vadd.f32 %v828, %v899
        %901 = vdwg.mxu0
        %902 = vmatprep.subr.mxu0 %v756
        %903 = vmatpush1.msra.mxu0 %v755
        %904 = vmatprep.subr.mxu0 %v758
        %905 = vmatpush1.msra.mxu0 %v757
        %906 = vmatprep.subr.mxu0 %v760
        %907 = vmatpush1.msra.mxu0 %v759
        %908 = vmatprep.subr.mxu0 %v762
        %909 = vmatpush1.msra.mxu0 %v761
        %910 = vmatprep.subr.mxu0 %v764
        %911 = vmatpush1.msra.mxu0 %v763
        %912 = vmatprep.subr.mxu0 %v766
        %913 = vmatpush1.msra.mxu0 %v765
        %914 = vmatprep.subr.mxu0 %v768
        %915 = vmatpush1.msra.mxu0 %v767
        %916 = vmatprep.subr.mxu0 %v770
        %917 = vmatpush1.msra.mxu0 %v769
        %918 = vmatprep.subr.mxu0 %v772
        %919 = vmatpush1.msra.mxu0 %v771
        %920 = vmatprep.subr.mxu0 %v774
        %921 = vmatpush1.msra.mxu0 %v773
        %922 = vmatprep.subr.mxu0 %v776
        %923 = vmatpush1.msra.mxu0 %v775
        %924 = vmatprep.subr.mxu0 %v778
        %925 = vmatpush1.msra.mxu0 %v777
        %926 = vmatprep.subr.mxu0 %v780
        %927 = vmatpush1.msra.mxu0 %v779
        %928 = vmatprep.subr.mxu0 %v782
        %929 = vmatpush1.msra.mxu0 %v781
        %930 = vmatprep.subr.mxu0 %v784
        %931 = vmatpush1.msra.mxu0 %v783
        %932 = vmatprep.subr.mxu0 %v786
        %933 = vmatpush1.msra.mxu0 %v785
        %934 = vmatprep.subr.mxu0 %v788
        %935 = vmatpush1.msra.mxu0 %v787
        %936 = vmatprep.subr.mxu0 %v790
        %937 = vmatpush1.msra.mxu0 %v789
        %938 = vmatprep.subr.mxu0 %v792
        %939 = vmatpush1.msra.mxu0 %v791
        %940 = vmatprep.subr.mxu0 %v794
        %941 = vmatpush1.msra.mxu0 %v793
        %942 = vmatprep.subr.mxu0 %v796
        %943 = vmatpush1.msra.mxu0 %v795
        %944 = vmatprep.subr.mxu0 %v798
        %945 = vmatpush1.msra.mxu0 %v797
        %946 = vmatprep.subr.mxu0 %v800
        %947 = vmatpush1.msra.mxu0 %v799
        %948 = vmatprep.subr.mxu0 %v802
        %949 = vmatpush1.msra.mxu0 %v801
        %950 = vmatprep.subr.mxu0 %v804
        %951 = vmatpush1.msra.mxu0 %v803
        %952 = vmatprep.subr.mxu0 %v806
        %953 = vmatpush1.msra.mxu0 %v805
        %954 = vmatprep.subr.mxu0 %v808
        %955 = vmatpush1.msra.mxu0 %v807
        %956 = vmatprep.subr.mxu0 %v810
        %957 = vmatpush1.msra.mxu0 %v809
        %958 = vmatprep.subr.mxu0 %v812
        %959 = vmatpush1.msra.mxu0 %v811
        %960 = vmatprep.subr.mxu0 %v814
        %961 = vmatpush1.msra.mxu0 %v813
        %962 = vmatprep.subr.mxu0 %v816
        %963 = vmatpush1.msra.mxu0 %v815
        %964 = vmatprep.subr.mxu0 %v818
        %965 = vmatpush1.msra.mxu0 %v817
        %966 = vmatprep.mubr.f32.mxu0 %v690
        %967 = vmatmul.mubr.f32.gmra.mrb[0].mxu0 %v689
        %v968 = vpop.f32.mrb[0].mxu0
        %v969 = vadd.f32 %v898, %v968
        %v970 = vpop.f32.mrb[0].mxu0
        %v971 = vadd.f32 %v900, %v970
        %972 = vdwg.mxu0
        %v973 = vmax.f32 %v969, 0.0
        %v974 = vmax.f32 %v971, 0.0
        %v975 = vld [vmem:[#allocation8] sm:$0xff]
        %v976 = vld [vmem:[#allocation8 + $0x8] sm:$0xff]
        %v977 = vld [vmem:[#allocation8 + $0x10] sm:$0xff]
        %v978 = vld [vmem:[#allocation8 + $0x18] sm:$0xff]
        %v979 = vld [vmem:[#allocation8 + $0x20] sm:$0xff]
        %v980 = vld [vmem:[#allocation8 + $0x28] sm:$0xff]
        %v981 = vld [vmem:[#allocation8 + $0x30] sm:$0xff]
        %v982 = vld [vmem:[#allocation8 + $0x38] sm:$0xff]
        %v983 = vld [vmem:[#allocation8 + $0x40] sm:$0xff]
        %v984 = vld [vmem:[#allocation8 + $0x48] sm:$0xff]
        %v985 = vld [vmem:[#allocation8 + $0x50] sm:$0xff]
        %v986 = vld [vmem:[#allocation8 + $0x58] sm:$0xff]
        %v987 = vld [vmem:[#allocation8 + $0x60] sm:$0xff]
        %v988 = vld [vmem:[#allocation8 + $0x68] sm:$0xff]
        %v989 = vld [vmem:[#allocation8 + $0x70] sm:$0xff]
        %v990 = vld [vmem:[#allocation8 + $0x78] sm:$0xff]
        %v991 = vld [vmem:[#allocation8 + $0x80] sm:$0xff]
        %v992 = vld [vmem:[#allocation8 + $0x88] sm:$0xff]
        %v993 = vld [vmem:[#allocation8 + $0x90] sm:$0xff]
        %v994 = vld [vmem:[#allocation8 + $0x98] sm:$0xff]
        %v995 = vld [vmem:[#allocation8 + $0xa0] sm:$0xff]
        %v996 = vld [vmem:[#allocation8 + $0xa8] sm:$0xff]
        %v997 = vld [vmem:[#allocation8 + $0xb0] sm:$0xff]
        %v998 = vld [vmem:[#allocation8 + $0xb8] sm:$0xff]
        %v999 = vld [vmem:[#allocation8 + $0xc0] sm:$0xff]
        %v1000 = vld [vmem:[#allocation8 + $0xc8] sm:$0xff]
        %v1001 = vld [vmem:[#allocation8 + $0xd0] sm:$0xff]
        %v1002 = vld [vmem:[#allocation8 + $0xd8] sm:$0xff]
        %v1003 = vld [vmem:[#allocation8 + $0xe0] sm:$0xff]
        %v1004 = vld [vmem:[#allocation8 + $0xe8] sm:$0xff]
        %v1005 = vld [vmem:[#allocation8 + $0xf0] sm:$0xff]
        %v1006 = vld [vmem:[#allocation8 + $0xf8] sm:$0xff]
        %v1007 = vld [vmem:[%s6] sm:$0x1]
        %v1009 = vlaneseq
        %v1010 = vshrl.u32 %v1009, 7
        %v1011 = vsub.s32 0, %v1010
        %v1012 = vrot.slane %v1007, %v1011
        %1014 = vmatprep.subr.mxu0 0.0
        %1015 = vmatpush1.msra.mxu0 %v975
        %1016 = vmatprep.subr.mxu0 0.0
        %1017 = vmatpush1.msra.mxu0 %v976
        %1018 = vmatprep.subr.mxu0 0.0
        %1019 = vmatpush1.msra.mxu0 %v977
        %1020 = vmatprep.subr.mxu0 0.0
        %1021 = vmatpush1.msra.mxu0 %v978
        %1022 = vmatprep.subr.mxu0 0.0
        %1023 = vmatpush1.msra.mxu0 %v979
        %1024 = vmatprep.subr.mxu0 0.0
        %1025 = vmatpush1.msra.mxu0 %v980
        %1026 = vmatprep.subr.mxu0 0.0
        %1027 = vmatpush1.msra.mxu0 %v981
        %1028 = vmatprep.subr.mxu0 0.0
        %1029 = vmatpush1.msra.mxu0 %v982
        %1030 = vmatprep.subr.mxu0 0.0
        %1031 = vmatpush1.msra.mxu0 %v983
        %1032 = vmatprep.subr.mxu0 0.0
        %1033 = vmatpush1.msra.mxu0 %v984
        %1034 = vmatprep.subr.mxu0 0.0
        %1035 = vmatpush1.msra.mxu0 %v985
        %1036 = vmatprep.subr.mxu0 0.0
        %1037 = vmatpush1.msra.mxu0 %v986
        %1038 = vmatprep.subr.mxu0 0.0
        %1039 = vmatpush1.msra.mxu0 %v987
        %1040 = vmatprep.subr.mxu0 0.0
        %1041 = vmatpush1.msra.mxu0 %v988
        %1042 = vmatprep.subr.mxu0 0.0
        %1043 = vmatpush1.msra.mxu0 %v989
        %1044 = vmatprep.subr.mxu0 0.0
        %1045 = vmatpush1.msra.mxu0 %v990
        %1046 = vmatprep.subr.mxu0 0.0
        %1047 = vmatpush1.msra.mxu0 %v991
        %1048 = vmatprep.subr.mxu0 0.0
        %1049 = vmatpush1.msra.mxu0 %v992
        %1050 = vmatprep.subr.mxu0 0.0
        %1051 = vmatpush1.msra.mxu0 %v993
        %1052 = vmatprep.subr.mxu0 0.0
        %1053 = vmatpush1.msra.mxu0 %v994
        %1054 = vmatprep.subr.mxu0 0.0
        %1055 = vmatpush1.msra.mxu0 %v995
        %1056 = vmatprep.subr.mxu0 0.0
        %1057 = vmatpush1.msra.mxu0 %v996
        %1058 = vmatprep.subr.mxu0 0.0
        %1059 = vmatpush1.msra.mxu0 %v997
        %1060 = vmatprep.subr.mxu0 0.0
        %1061 = vmatpush1.msra.mxu0 %v998
        %1062 = vmatprep.subr.mxu0 0.0
        %1063 = vmatpush1.msra.mxu0 %v999
        %1064 = vmatprep.subr.mxu0 0.0
        %1065 = vmatpush1.msra.mxu0 %v1000
        %1066 = vmatprep.subr.mxu0 0.0
        %1067 = vmatpush1.msra.mxu0 %v1001
        %1068 = vmatprep.subr.mxu0 0.0
        %1069 = vmatpush1.msra.mxu0 %v1002
        %1070 = vmatprep.subr.mxu0 0.0
        %1071 = vmatpush1.msra.mxu0 %v1003
        %1072 = vmatprep.subr.mxu0 0.0
        %1073 = vmatpush1.msra.mxu0 %v1004
        %1074 = vmatprep.subr.mxu0 0.0
        %1075 = vmatpush1.msra.mxu0 %v1005
        %1076 = vmatprep.subr.mxu0 0.0
        %1077 = vmatpush1.msra.mxu0 %v1006
        %1078 = vmatprep.mubr.f32.mxu0 %v974
        %1079 = vmatmul.mubr.f32.gmra.mrb[0].mxu0 %v973
        %v1080 = vpop.f32.mrb[0].mxu0
        %v1081 = vadd.f32 %v1012, %v1080
        %v1082 = vpop.f32.mrb[0].mxu0
        %1083 = vdwg.mxu0
        %v1084 = vmax.f32 %v1081, 0.0
        %1085 = vadd.xlane.f32.xlu0 %v1084
        %v1086 = vpop.xlane.xlu0 %1085
        %v1087 = vrcp.pop 128.0
        %v1088 = vmul.f32 %v1086, %v1087
        %v1089 = vsub.f32 %v1084, %v1088
        %v1090 = vmul.f32 %v1089, %v1089
        %1091 = vadd.xlane.f32.xlu0 %v1090
        %v1092 = vpop.xlane.xlu0 %1091
        %v1093 = vrcp.pop 127.0
        %v1094 = vmul.f32 %v1092, %v1093
        %v1095 = vrsqrt.pop %v1094
        %v1096 = vmul.f32 %v1094, %v1095
        %vm1097 = vcmp.eq.f32.partialorder %v1094, inf
        %v1098 = vsel %vm1097, %v1094, %v1096
        %vm1099 = vcmp.eq.f32.partialorder %v1094, 0.0
        %v1100 = vand.u32 %v1094, 2147483648
        %v1101 = vsel %vm1099, %v1100, %v1098
        %v1102 = vadd.f32 %v1101, 1e-06
        %v1103 = vrcp.pop %v1102
        %v1104 = vmul.f32 1.0, %v1103
        %v1105 = vld [vmem:[%s7] sm:$0x1]
        %v1106 = vmul.f32 %v1089, %v1104
        %v1108 = vlaneseq
        %v1109 = vshrl.u32 %v1108, 7
        %v1110 = vsub.s32 0, %v1109
        %v1111 = vrot.slane %v1105, %v1110
        %v1113 = vmul.f32 %v1111, %v1106
        %v1114 = vld [vmem:[%s8] sm:$0x1]
        %v1116 = vlaneseq
        %v1117 = vshrl.u32 %v1116, 7
        %v1118 = vsub.s32 0, %v1117
        %v1119 = vrot.slane %v1114, %v1118
        %v1121 = vadd.f32 %v1113, %v1119
        %1122 = vst [vmem:[%s392] sm:$0xff] %v1121
        %s1123 = sand.u32 %s230, 1
        %s1124 = scalar_lea.sflag [#allocation4], %s1123
        %s1125 = sand.u32 %s230, 1
        %s1126 = smul.addr %s1125, 8
        %s1127 = scalar_lea.vmem [#allocation10], %s1126
        // Predicated region
        $region73: #{tpu_custom_call.1} parent=55 // pred_check
          %p1128 = pneg %p240
        $region74: #{tpu_custom_call.1} parent=55 // pred_check_branch
          %1130 = sbr.rel (%p1128) target = $region76
        $region75: #{tpu_custom_call.1} parent=55 // pred_region
          %s1132 = ssub.s32 128, 128
          %1133 = vsyncadd %s1124, %s1132
          %s1134 = smul.addr %s28, 128
          %s1135 = scalar_lea.hbm %s9, %s1134
          %s1137 = sshll.u32 %s1127, 4
          %s1138 = int_to_ptr.vmem [resolvable:$true] %s1137
          %1140 = dma.vmem_to_hbm [thread:$0]  %s1138, 128, %s1135, %s1124
        $region76: #{tpu_custom_call.1} parent=55 // pred_fallthru
          _
      $region56: #{tpu_custom_call.1} parent=5 // pred_fallthru
        _
      %p1141 = scmp.le.s32.totalorder 2, %s23
      // Predicated region
      $region77: #{tpu_custom_call.1} parent=5 // pred_check
        %p1142 = pneg %p1141
      $region78: #{tpu_custom_call.1} parent=5 // pred_check_branch
        %1144 = sbr.rel (%p1142) target = $region80
      $region79: #{tpu_custom_call.1} parent=5 // pred_region
        %s1145 = ssub.s32 %s23, 2
        // Predicated region
        $region81: #{tpu_custom_call.1} parent=79 // pred_check
          %p1146 = pneg %p246
        $region82: #{tpu_custom_call.1} parent=79 // pred_check_branch
          %1148 = sbr.rel (%p1146) target = $region84
        $region83: #{tpu_custom_call.1} parent=79 // pred_region
          %s1149 = sand.u32 %s231, 1
          %s1150 = scalar_lea.sflag [#allocation4], %s1149
          %s1151 = sand.u32 %s231, 1
          %s1152 = smul.addr %s1151, 8
          %s1153 = scalar_lea.vmem [#allocation10], %s1152
          %1154 = dma.done %s1150, 128
        $region84: #{tpu_custom_call.1} parent=79 // pred_fallthru
          _
      $region80: #{tpu_custom_call.1} parent=5 // pred_fallthru
        _
    $region6: #{tpu_custom_call.1} parent=1 // loop_footer
      %s27 = sadd.s32 1, %s23
    $region7: #{tpu_custom_call.1} parent=1 // loop_footer_branch
      %22 = sbr.rel target = $region3
    $region8: #{tpu_custom_call.1} parent=1 // loop_exit
      _
    %1155 = vsyncpa [#allocation3], 1
    %s1156 = scalar_lea.sflag [#allocation3], 1
    %1157 = vsyncpa %s1156, 1
    %1158 = vsyncpa [#allocation6], 1
    %1159 = vsyncpa [#allocation9], 1
    %1160 = vsyncpa [#allocation4], 1
    %s1161 = scalar_lea.sflag [#allocation4], 1
    %1162 = vsyncpa %s1161, 1

</llo_original>
